<compile_context>
chip_gen: v5e
topology: v5e:2x2
jax: 0.10.0
libtpu: 0.0.40
codegen_flags: <defaults>
</compile_context>

<pallas_src>
import functools
import math

import jax
import jax.numpy as jnp
from jax.experimental import pallas as pl
from jax.experimental.pallas import tpu as pltpu


def _ffn_kernel(x_ref, w1_ref, b1_ref, w2_ref, b2_ref, *rest,
                dropout_p, activation):
    if dropout_p > 0.0:
        rand_ref, o_ref = rest
    else:
        (o_ref,) = rest

    # linear1: (TM, D) @ (D, H) + b1  -- bf16 operands, f32 accumulation (MXU-native).
    h = jnp.dot(x_ref[...].astype(jnp.bfloat16), w1_ref[...],
                preferred_element_type=jnp.float32) + b1_ref[...]
    # linear2: (TM, H) @ (H, D) + b2
    y = jnp.dot(h.astype(jnp.bfloat16), w2_ref[...],
                preferred_element_type=jnp.float32) + b2_ref[...]

    # Activation is applied AFTER both linears (matches the PyTorch forward exactly).
    if activation == "relu":
        a = jnp.maximum(y, 0.0)
    elif activation == "gelu":
        a = jax.nn.gelu(y, approximate=False)      # nn.GELU default = exact erf
    elif activation == "swish":
        a = y * jax.nn.sigmoid(y)                  # nn.SiLU
    else:
        raise ValueError(f"unknown activation: {activation}")

    if dropout_p > 0.0:
        # Inverted dropout, training-mode (nn.Dropout is built inside forward()).
        scale = 0.0 if dropout_p >= 1.0 else 1.0 / (1.0 - dropout_p)
        keep = rand_ref[...] >= jnp.float32(dropout_p)
        a = jnp.where(keep, a * scale, 0.0)

    o_ref[...] = a.astype(o_ref.dtype)


def _pick_tile_m(m, cap=512):
    """Largest row-tile <= cap that divides M (multiple of 8 when actually tiling)."""
    if m <= cap:
        return m
    t = cap - (cap % 8)
    while t >= 8:
        if m % t == 0:
            return t
        t -= 8
    return m  # fall back: a single tile spanning all rows


def _vmem_limit_bytes(tile_m, d, h, has_dropout):
    f32, bf16 = 4, 2
    tiles = tile_m * d * f32 * 2 * (3 if has_dropout else 2)  # x (+rand) + out, 2-buffered
    weights = 2 * d * h * bf16 * 2                            # w1 + w2, 2-buffered
    biases = (d + h) * f32 * 2
    interm = 2 * tile_m * h * f32                             # live h / y intermediates
    est = tiles + weights + biases + interm
    return int(min(max(2 * est, 16 << 20), 48 << 20))         # 2x headroom, v7x-safe cap


def feed_forward_nn(x, w1, b1, w2, b2, *, dropout_p=0.1, activation="relu",
                    dropout_key=None, tile_m=None):
    """x: (B, S, D) f32; w1: (D, H); b1: (H,); w2: (H, D); b2: (D,). Returns (B, S, D)."""
    B, S, D = x.shape
    H = w1.shape[1]
    M = B * S
    xm = x.reshape(M, D)

    if tile_m is None:
        tile_m = _pick_tile_m(M)
    assert M % tile_m == 0, "M must be divisible by tile_m"
    grid = (M // tile_m,)

    # bf16 weights for the MXU; biases stay f32 for the VPU adds.
    w1_bf = w1.astype(jnp.bfloat16)
    w2_bf = w2.astype(jnp.bfloat16)
    b1_2d = b1.reshape(1, H).astype(jnp.float32)
    b2_2d = b2.reshape(1, D).astype(jnp.float32)

    args = [xm, w1_bf, b1_2d, w2_bf, b2_2d]
    in_specs = [
        pl.BlockSpec((tile_m, D), lambda i: (i, 0)),   # x row-tile
        pl.BlockSpec((D, H), lambda i: (0, 0)),        # w1 (resident)
        pl.BlockSpec((1, H), lambda i: (0, 0)),        # b1
        pl.BlockSpec((H, D), lambda i: (0, 0)),        # w2 (resident)
        pl.BlockSpec((1, D), lambda i: (0, 0)),        # b2
    ]

    has_dropout = dropout_p > 0.0
    if has_dropout:
        if dropout_key is None:
            dropout_key = jax.random.PRNGKey(0)
        # Host-side uniform randoms (pltpu.prng_* lacks a CPU/interpret lowering),
        # streamed per-tile alongside x.
        rand = jax.random.uniform(dropout_key, (M, D), jnp.float32)
        args.append(rand)
        in_specs.append(pl.BlockSpec((tile_m, D), lambda i: (i, 0)))

    kernel = functools.partial(_ffn_kernel, dropout_p=float(dropout_p),
                               activation=activation)

    out = pl.pallas_call(
        kernel,
        out_shape=jax.ShapeDtypeStruct((M, D), x.dtype),
        grid_spec=pltpu.PrefetchScalarGridSpec(
            num_scalar_prefetch=0,
            grid=grid,
            in_specs=in_specs,
            out_specs=pl.BlockSpec((tile_m, D), lambda i: (i, 0)),
        ),
        compiler_params=pltpu.CompilerParams(
            dimension_semantics=("parallel",),   # M-tiles independent -> v7x 2 TCs
            vmem_limit_bytes=_vmem_limit_bytes(tile_m, D, H, has_dropout),
        ),
    )(*args)

    return out.reshape(B, S, D)


if __name__ == "__main__":
    # FeedForwardNN(d_embeddings=128, d_hidden=256, dropout=0.1, activation='relu').
    # D and H are multiples of 128 so stores are lane-dense (unmasked vst) and the
    # MXU N-dimension is fully used.
    B, S, D, H = 2, 8, 128, 256
    dropout_p = 0.1

    key = jax.random.PRNGKey(0)
    k_x, k_w1, k_b1, k_w2, k_b2, k_drop = jax.random.split(key, 6)

    x = jax.random.normal(k_x, (B, S, D), jnp.float32)

    # Deterministic init mimicking nn.Linear (uniform +/- 1/sqrt(fan_in)).
    bound1 = 1.0 / math.sqrt(D)
    w1 = jax.random.uniform(k_w1, (D, H), jnp.float32, -bound1, bound1)  # linear1.weight.T
    b1 = jax.random.uniform(k_b1, (H,), jnp.float32, -bound1, bound1)    # linear1.bias
    bound2 = 1.0 / math.sqrt(H)
    w2 = jax.random.uniform(k_w2, (H, D), jnp.float32, -bound2, bound2)  # linear2.weight.T
    b2 = jax.random.uniform(k_b2, (D,), jnp.float32, -bound2, bound2)    # linear2.bias

    out = feed_forward_nn(x, w1, b1, w2, b2, dropout_p=dropout_p,
                          activation="relu", dropout_key=k_drop)
    jax.block_until_ready(out)
    assert out.shape == (B, S, D)

    # Pure-JAX reference using the same bf16 casts and the same dropout mask.
    xm = x.reshape(B * S, D)
    h = jnp.dot(xm.astype(jnp.bfloat16), w1.astype(jnp.bfloat16),
                preferred_element_type=jnp.float32) + b1[None, :]
    y = jnp.dot(h.astype(jnp.bfloat16), w2.astype(jnp.bfloat16),
                preferred_element_type=jnp.float32) + b2[None, :]
    a = jnp.maximum(y, 0.0)
    rand = jax.random.uniform(k_drop, (B * S, D), jnp.float32)
    ref = jnp.where(rand >= dropout_p, a * (1.0 / (1.0 - dropout_p)), 0.0)
    ref = ref.reshape(B, S, D)
    assert jnp.allclose(out, ref, atol=2e-2, rtol=2e-2), "mismatch vs JAX reference"

    print("KERNEL_OK")
</pallas_src>

<mosaic_0001>
module attributes {stable_mosaic.version = 11 : i64} {
  func.func @_ffn_kernel(%arg0: i32, %arg1: memref<16x128xf32, #tpu.memory_space<vmem>>, %arg2: memref<128x256xbf16, #tpu.memory_space<vmem>>, %arg3: memref<1x256xf32, #tpu.memory_space<vmem>>, %arg4: memref<256x128xbf16, #tpu.memory_space<vmem>>, %arg5: memref<1x128xf32, #tpu.memory_space<vmem>>, %arg6: memref<16x128xf32, #tpu.memory_space<vmem>>, %arg7: memref<16x128xf32, #tpu.memory_space<vmem>>) attributes {dimension_semantics = [#tpu.dimension_semantics<parallel>], iteration_bounds = array<i64: 1>, scalar_prefetch = 0 : i64, scratch_operands = 0 : i64, tpu.core_type = #tpu.core_type<tc>, window_params = [{transform_indices = @transform_0, window_bounds = array<i64: 16, 128>}, {pipeline_mode = #tpu.pipeline_mode<synchronous>, transform_indices = @transform_1, window_bounds = array<i64: 128, 256>}, {pipeline_mode = #tpu.pipeline_mode<synchronous>, transform_indices = @transform_2, window_bounds = array<i64: 1, 256>}, {pipeline_mode = #tpu.pipeline_mode<synchronous>, transform_indices = @transform_3, window_bounds = array<i64: 256, 128>}, {pipeline_mode = #tpu.pipeline_mode<synchronous>, transform_indices = @transform_4, window_bounds = array<i64: 1, 128>}, {transform_indices = @transform_5, window_bounds = array<i64: 16, 128>}, {transform_indices = @transform_6, window_bounds = array<i64: 16, 128>}]} {
    %c0 = arith.constant 0 : index
    %c0_0 = arith.constant 0 : index
    %0 = vector.load %arg1[%c0, %c0_0] : memref<16x128xf32, #tpu.memory_space<vmem>>, vector<16x128xf32>
    %1 = arith.truncf %0 : vector<16x128xf32> to vector<16x128xbf16>
    %c0_1 = arith.constant 0 : index
    %c0_2 = arith.constant 0 : index
    %2 = vector.load %arg2[%c0_1, %c0_2] : memref<128x256xbf16, #tpu.memory_space<vmem>>, vector<128x256xbf16>
    %cst = arith.constant dense<0.000000e+00> : vector<16x256xf32>
    %3 = tpu.matmul %1, %2, %cst {dimension_numbers = #tpu.dot_dimension_numbers<[1], [0], [0], [1], [0, 0, 1, 1], [], []>} : vector<16x128xbf16>, vector<128x256xbf16>, vector<16x256xf32> -> vector<16x256xf32>
    %c0_3 = arith.constant 0 : index
    %c0_4 = arith.constant 0 : index
    %4 = vector.load %arg3[%c0_3, %c0_4] : memref<1x256xf32, #tpu.memory_space<vmem>>, vector<1x256xf32>
    %5 = vector.broadcast %4 : vector<1x256xf32> to vector<16x256xf32>
    %6 = arith.addf %3, %5 : vector<16x256xf32>
    %7 = arith.truncf %6 : vector<16x256xf32> to vector<16x256xbf16>
    %c0_5 = arith.constant 0 : index
    %c0_6 = arith.constant 0 : index
    %8 = vector.load %arg4[%c0_5, %c0_6] : memref<256x128xbf16, #tpu.memory_space<vmem>>, vector<256x128xbf16>
    %cst_7 = arith.constant dense<0.000000e+00> : vector<16x128xf32>
    %9 = tpu.matmul %7, %8, %cst_7 {dimension_numbers = #tpu.dot_dimension_numbers<[1], [0], [0], [1], [0, 0, 1, 1], [], []>} : vector<16x256xbf16>, vector<256x128xbf16>, vector<16x128xf32> -> vector<16x128xf32>
    %c0_8 = arith.constant 0 : index
    %c0_9 = arith.constant 0 : index
    %10 = vector.load %arg5[%c0_8, %c0_9] : memref<1x128xf32, #tpu.memory_space<vmem>>, vector<1x128xf32>
    %11 = vector.broadcast %10 : vector<1x128xf32> to vector<16x128xf32>
    %12 = arith.addf %9, %11 : vector<16x128xf32>
    %cst_10 = arith.constant 0.000000e+00 : f32
    %13 = vector.broadcast %cst_10 : f32 to vector<16x128xf32>
    %14 = arith.maximumf %12, %13 : vector<16x128xf32>
    %c0_11 = arith.constant 0 : index
    %c0_12 = arith.constant 0 : index
    %15 = vector.load %arg6[%c0_11, %c0_12] : memref<16x128xf32, #tpu.memory_space<vmem>>, vector<16x128xf32>
    %cst_13 = arith.constant 1.000000e-01 : f32
    %16 = vector.broadcast %cst_13 : f32 to vector<16x128xf32>
    %17 = arith.cmpf oge, %15, %16 : vector<16x128xf32>
    %cst_14 = arith.constant 1.11111116 : f32
    %18 = vector.broadcast %cst_14 : f32 to vector<16x128xf32>
    %19 = arith.mulf %14, %18 : vector<16x128xf32>
    %cst_15 = arith.constant 0.000000e+00 : f32
    %20 = vector.broadcast %cst_15 : f32 to vector<16x128xf32>
    %21 = arith.select %17, %19, %20 : vector<16x128xi1>, vector<16x128xf32>
    %c0_16 = arith.constant 0 : index
    %c0_17 = arith.constant 0 : index
    %22 = vector.load %arg7[%c0_16, %c0_17] : memref<16x128xf32, #tpu.memory_space<vmem>>, vector<16x128xf32>
    tpu.vector_store %arg7[%c0_16, %c0_17], %21 {strides = array<i32>} : memref<16x128xf32, #tpu.memory_space<vmem>>, vector<16x128xf32>,
    return
  }
  func.func @transform_0(%arg0: i32) -> (i32, i32) {
    %c0_i32 = arith.constant 0 : i32
    %c0_i32_0 = arith.constant 0 : i32
    return %arg0, %c0_i32 : i32, i32
  }
  func.func @transform_1(%arg0: i32) -> (i32, i32) {
    %c0_i32 = arith.constant 0 : i32
    %c0_i32_0 = arith.constant 0 : i32
    %c0_i32_1 = arith.constant 0 : i32
    return %c0_i32, %c0_i32_0 : i32, i32
  }
  func.func @transform_2(%arg0: i32) -> (i32, i32) {
    %c0_i32 = arith.constant 0 : i32
    %c0_i32_0 = arith.constant 0 : i32
    %c0_i32_1 = arith.constant 0 : i32
    return %c0_i32, %c0_i32_0 : i32, i32
  }
  func.func @transform_3(%arg0: i32) -> (i32, i32) {
    %c0_i32 = arith.constant 0 : i32
    %c0_i32_0 = arith.constant 0 : i32
    %c0_i32_1 = arith.constant 0 : i32
    return %c0_i32, %c0_i32_0 : i32, i32
  }
  func.func @transform_4(%arg0: i32) -> (i32, i32) {
    %c0_i32 = arith.constant 0 : i32
    %c0_i32_0 = arith.constant 0 : i32
    %c0_i32_1 = arith.constant 0 : i32
    return %c0_i32, %c0_i32_0 : i32, i32
  }
  func.func @transform_5(%arg0: i32) -> (i32, i32) {
    %c0_i32 = arith.constant 0 : i32
    %c0_i32_0 = arith.constant 0 : i32
    return %arg0, %c0_i32 : i32, i32
  }
  func.func @transform_6(%arg0: i32) -> (i32, i32) {
    %c0_i32 = arith.constant 0 : i32
    %c0_i32_0 = arith.constant 0 : i32
    return %arg0, %c0_i32 : i32, i32
  }
}

</mosaic_0001>

<llo_original>
// kernel: tpu_custom_call.1
$region0: #{tpu_custom_call.1}
  #allocation0 [shape = 'u32[]', space=smem, size = 0x4, offset = 0x4, fixed_abs, tag = 'smem constant byte address 0x4 - core index']
  #allocation1 [shape = 'u32[72,128]{1,0:T(1,128)}', space=vmem, size = 0x9000, scoped, tag = 'internal scratch']
  %s0 = inlined_call_operand.hbm [shape: f32[16,128], index: 0, kind: input, shape index: {}]
  %s1 = inlined_call_operand.hbm [shape: bf16[128,256], index: 1, kind: input, shape index: {}]
  %s2 = inlined_call_operand.hbm [shape: f32[1,256], index: 2, kind: input, shape index: {}]
  %s3 = inlined_call_operand.hbm [shape: bf16[256,128], index: 3, kind: input, shape index: {}]
  %s4 = inlined_call_operand.vmem [shape: f32[1,128], index: 4, kind: input, shape index: {}]
  %s5 = inlined_call_operand.hbm [shape: f32[16,128], index: 5, kind: input, shape index: {}]
  %s6 = inlined_call_operand.hbm [shape: f32[16,128], index: 6, kind: output, shape index: {}]
  %s7 = sld [smem:[#allocation0]]
  $region54: #{tpu_custom_call.1} parent=0
    _
  %s9 = ssub.s32 1, %s7
  %s10 = scalar_select 0, %s9, %s7
  $region1: #{tpu_custom_call.1} parent=0
    #allocation2 [shape = 'u8[8192]{0}', space=vmem, size = 0x2000, scoped, tag = 'input window, operand 0, single buffered']
    #allocation3 [shape = 's32[1]{0}', space=sflag, size = 0x4, scoped, tag = 'scoped memory for tpu_custom_call.1']
    #allocation4 [shape = 's32[1]{0}', space=sflag, size = 0x4, scoped, tag = 'scoped memory for tpu_custom_call.1']
    #allocation5 [shape = 'u8[65536]{0}', space=vmem, size = 0x10000, scoped, tag = 'input window, operand 1, single buffered']
    #allocation6 [shape = 's32[1]{0}', space=sflag, size = 0x4, scoped, tag = 'scoped memory for tpu_custom_call.1']
    #allocation7 [shape = 'u8[1024]{0}', space=vmem, size = 0x400, scoped, tag = 'input window, operand 2, single buffered']
    #allocation8 [shape = 'u8[65536]{0}', space=vmem, size = 0x10000, scoped, tag = 'input window, operand 3, single buffered']
    #allocation9 [shape = 's32[1]{0}', space=sflag, size = 0x4, scoped, tag = 'scoped memory for tpu_custom_call.1']
    #allocation10 [shape = 'u8[8192]{0}', space=vmem, size = 0x2000, scoped, tag = 'input window, operand 5, single buffered']
    #allocation11 [shape = 'u8[8192]{0}', space=vmem, size = 0x2000, scoped, tag = 'output window, operand 0, single buffered']
    %11 = vsyncpa [#allocation3], 0
    %12 = vsyncpa [#allocation6], 0
    %13 = vsyncpa [#allocation9], 0
    %14 = vsyncpa [#allocation4], 0
    // Predicated region
    $region2: #{tpu_custom_call.1} parent=1 // pred_check
      _
    $region3: #{tpu_custom_call.1} parent=1 // pred_check_branch
      %16 = sbr.rel (0) target = $region5
    $region4: #{tpu_custom_call.1} parent=1 // pred_region
      %18 = vsyncadd [#allocation3], 0
      %s19 = sshll.u32 %s0, 4
      %s20 = int_to_ptr.hbm [resolvable:$true] %s19
      %s21 = sshll.u32 [#allocation2], 4
      %s22 = int_to_ptr.vmem [resolvable:$true] %s21
      %27 = dma.hbm_to_vmem [thread:$0]  %s20, 256, %s22, [#allocation3], 128, 128, 8
    $region5: #{tpu_custom_call.1} parent=1 // pred_fallthru
      _
    // Predicated region
    $region6: #{tpu_custom_call.1} parent=1 // pred_check
      _
    $region7: #{tpu_custom_call.1} parent=1 // pred_check_branch
      %29 = sbr.rel (0) target = $region9
    $region8: #{tpu_custom_call.1} parent=1 // pred_region
      %31 = vsyncadd [#allocation6], 0
      %s32 = sshll.u32 %s1, 4
      %s33 = int_to_ptr.hbm [resolvable:$true] %s32
      %s34 = sshll.u32 [#allocation5], 4
      %s35 = int_to_ptr.vmem [resolvable:$true] %s34
      %40 = dma.hbm_to_vmem [thread:$0]  %s33, 2048, %s35, [#allocation6], 128, 128, 8
    $region9: #{tpu_custom_call.1} parent=1 // pred_fallthru
      _
    // Predicated region
    $region10: #{tpu_custom_call.1} parent=1 // pred_check
      _
    $region11: #{tpu_custom_call.1} parent=1 // pred_check_branch
      %42 = sbr.rel (0) target = $region13
    $region12: #{tpu_custom_call.1} parent=1 // pred_region
      %44 = vsyncadd [#allocation6], 0
      %s46 = sshll.u32 %s2, 4
      %s47 = int_to_ptr.hbm [resolvable:$true] %s46
      %s48 = sshll.u32 [#allocation7], 4
      %s49 = int_to_ptr.vmem [resolvable:$true] %s48
      %51 = dma.hbm_to_vmem [thread:$0]  %s47, 32, %s49, [#allocation6]
    $region13: #{tpu_custom_call.1} parent=1 // pred_fallthru
      _
    // Predicated region
    $region14: #{tpu_custom_call.1} parent=1 // pred_check
      _
    $region15: #{tpu_custom_call.1} parent=1 // pred_check_branch
      %53 = sbr.rel (0) target = $region17
    $region16: #{tpu_custom_call.1} parent=1 // pred_region
      %55 = vsyncadd [#allocation9], 0
      %s56 = sshll.u32 %s3, 4
      %s57 = int_to_ptr.hbm [resolvable:$true] %s56
      %s58 = sshll.u32 [#allocation8], 4
      %s59 = int_to_ptr.vmem [resolvable:$true] %s58
      %64 = dma.hbm_to_vmem [thread:$0]  %s57, 2048, %s59, [#allocation9], 64, 64, 4
    $region17: #{tpu_custom_call.1} parent=1 // pred_fallthru
      _
    // Predicated region
    $region18: #{tpu_custom_call.1} parent=1 // pred_check
      _
    $region19: #{tpu_custom_call.1} parent=1 // pred_check_branch
      %66 = sbr.rel (0) target = $region21
    $region20: #{tpu_custom_call.1} parent=1 // pred_region
      _
    $region21: #{tpu_custom_call.1} parent=1 // pred_fallthru
      _
    // Predicated region
    $region22: #{tpu_custom_call.1} parent=1 // pred_check
      _
    $region23: #{tpu_custom_call.1} parent=1 // pred_check_branch
      %68 = sbr.rel (0) target = $region25
    $region24: #{tpu_custom_call.1} parent=1 // pred_region
      %70 = vsyncadd [#allocation9], 0
      %s71 = sshll.u32 %s5, 4
      %s72 = int_to_ptr.hbm [resolvable:$true] %s71
      %s73 = sshll.u32 [#allocation10], 4
      %s74 = int_to_ptr.vmem [resolvable:$true] %s73
      %79 = dma.hbm_to_vmem [thread:$0]  %s72, 256, %s74, [#allocation9], 128, 128, 8
    $region25: #{tpu_custom_call.1} parent=1 // pred_fallthru
      _
    // Predicated region
    $region26: #{tpu_custom_call.1} parent=1 // pred_check
      _
    $region27: #{tpu_custom_call.1} parent=1 // pred_check_branch
      %81 = sbr.rel (0) target = $region29
    $region28: #{tpu_custom_call.1} parent=1 // pred_region
      %83 = dma.done [#allocation3], 256
    $region29: #{tpu_custom_call.1} parent=1 // pred_fallthru
      _
    // Predicated region
    $region30: #{tpu_custom_call.1} parent=1 // pred_check
      _
    $region31: #{tpu_custom_call.1} parent=1 // pred_check_branch
      %85 = sbr.rel (0) target = $region33
    $region32: #{tpu_custom_call.1} parent=1 // pred_region
      %87 = dma.done [#allocation6], 2048
    $region33: #{tpu_custom_call.1} parent=1 // pred_fallthru
      _
    // Predicated region
    $region34: #{tpu_custom_call.1} parent=1 // pred_check
      _
    $region35: #{tpu_custom_call.1} parent=1 // pred_check_branch
      %89 = sbr.rel (0) target = $region37
    $region36: #{tpu_custom_call.1} parent=1 // pred_region
      %91 = dma.done [#allocation6], 32
    $region37: #{tpu_custom_call.1} parent=1 // pred_fallthru
      _
    // Predicated region
    $region38: #{tpu_custom_call.1} parent=1 // pred_check
      _
    $region39: #{tpu_custom_call.1} parent=1 // pred_check_branch
      %93 = sbr.rel (0) target = $region41
    $region40: #{tpu_custom_call.1} parent=1 // pred_region
      %95 = dma.done [#allocation9], 2048
    $region41: #{tpu_custom_call.1} parent=1 // pred_fallthru
      _
    // Predicated region
    $region42: #{tpu_custom_call.1} parent=1 // pred_check
      _
    $region43: #{tpu_custom_call.1} parent=1 // pred_check_branch
      %97 = sbr.rel (0) target = $region45
    $region44: #{tpu_custom_call.1} parent=1 // pred_region
      %99 = dma.done [#allocation9], 256
    $region45: #{tpu_custom_call.1} parent=1 // pred_fallthru
      _
    %v100 = vld [vmem:[#allocation2] sm:$0xff]
    %v101 = vld [vmem:[#allocation2 + $0x8] sm:$0xff]
    %v102 = vpack.c.bf16 %v101, %v100
    %v103 = vld [vmem:[#allocation5] sm:$0xff]
    %v104 = vld [vmem:[#allocation5 + $0x8] sm:$0xff]
    %v105 = vld [vmem:[#allocation5 + $0x10] sm:$0xff]
    %v106 = vld [vmem:[#allocation5 + $0x18] sm:$0xff]
    %v107 = vld [vmem:[#allocation5 + $0x20] sm:$0xff]
    %v108 = vld [vmem:[#allocation5 + $0x28] sm:$0xff]
    %v109 = vld [vmem:[#allocation5 + $0x30] sm:$0xff]
    %v110 = vld [vmem:[#allocation5 + $0x38] sm:$0xff]
    %v111 = vld [vmem:[#allocation5 + $0x40] sm:$0xff]
    %v112 = vld [vmem:[#allocation5 + $0x48] sm:$0xff]
    %v113 = vld [vmem:[#allocation5 + $0x50] sm:$0xff]
    %v114 = vld [vmem:[#allocation5 + $0x58] sm:$0xff]
    %v115 = vld [vmem:[#allocation5 + $0x60] sm:$0xff]
    %v116 = vld [vmem:[#allocation5 + $0x68] sm:$0xff]
    %v117 = vld [vmem:[#allocation5 + $0x70] sm:$0xff]
    %v118 = vld [vmem:[#allocation5 + $0x78] sm:$0xff]
    %v119 = vld [vmem:[#allocation7] sm:$0x3]
    %v121 = vperm.slane %v119, 0
    %v122 = vperm.slane %v119, 1
    %v141 = vunpack.c.l.b16 %v103
    %v142 = vunpack.c.h.b16 %v103
    %v143 = vunpack.c.l.b16 %v104
    %v144 = vunpack.c.h.b16 %v104
    %v145 = vunpack.c.l.b16 %v105
    %v146 = vunpack.c.h.b16 %v105
    %v147 = vunpack.c.l.b16 %v106
    %v148 = vunpack.c.h.b16 %v106
    %v149 = vunpack.c.l.b16 %v107
    %v150 = vunpack.c.h.b16 %v107
    %v151 = vunpack.c.l.b16 %v108
    %v152 = vunpack.c.h.b16 %v108
    %v153 = vunpack.c.l.b16 %v109
    %v154 = vunpack.c.h.b16 %v109
    %v155 = vunpack.c.l.b16 %v110
    %v156 = vunpack.c.h.b16 %v110
    %v157 = vunpack.c.l.b16 %v111
    %v158 = vunpack.c.h.b16 %v111
    %v159 = vunpack.c.l.b16 %v112
    %v160 = vunpack.c.h.b16 %v112
    %v161 = vunpack.c.l.b16 %v113
    %v162 = vunpack.c.h.b16 %v113
    %v163 = vunpack.c.l.b16 %v114
    %v164 = vunpack.c.h.b16 %v114
    %v165 = vunpack.c.l.b16 %v115
    %v166 = vunpack.c.h.b16 %v115
    %v167 = vunpack.c.l.b16 %v116
    %v168 = vunpack.c.h.b16 %v116
    %v169 = vunpack.c.l.b16 %v117
    %v170 = vunpack.c.h.b16 %v117
    %v171 = vunpack.c.l.b16 %v118
    %v172 = vunpack.c.h.b16 %v118
    %v173 = vpack.c.b16 %v143, %v141
    %v174 = vpack.c.b16 %v144, %v142
    %v175 = vpack.c.b16 %v147, %v145
    %v176 = vpack.c.b16 %v148, %v146
    %v177 = vpack.c.b16 %v151, %v149
    %v178 = vpack.c.b16 %v152, %v150
    %v179 = vpack.c.b16 %v155, %v153
    %v180 = vpack.c.b16 %v156, %v154
    %v181 = vpack.c.b16 %v159, %v157
    %v182 = vpack.c.b16 %v160, %v158
    %v183 = vpack.c.b16 %v163, %v161
    %v184 = vpack.c.b16 %v164, %v162
    %v185 = vpack.c.b16 %v167, %v165
    %v186 = vpack.c.b16 %v168, %v166
    %v187 = vpack.c.b16 %v171, %v169
    %v188 = vpack.c.b16 %v172, %v170
    %205 = vmatpush.bf16.msra.mxu0 %v187
    %206 = vmatpush.bf16.msra.mxu0 %v185
    %207 = vmatpush.bf16.msra.mxu0 %v183
    %208 = vmatpush.bf16.msra.mxu0 %v181
    %209 = vmatpush.bf16.msra.mxu0 %v179
    %210 = vmatpush.bf16.msra.mxu0 %v177
    %211 = vmatpush.bf16.msra.mxu0 %v175
    %212 = vmatpush.bf16.msra.mxu0 %v173
    %213 = vmatmul.bf16.gmra.mxu0 %v102
    %v214 = vpop.f32.mrf.mxu0
    %v215 = vadd.f32 %v121, %v214
    %v216 = vpop.f32.mrf.mxu0
    %v217 = vadd.f32 %v121, %v216
    %218 = vdwg.mxu0
    %219 = vmatpush.bf16.msra.mxu0 %v188
    %220 = vmatpush.bf16.msra.mxu0 %v186
    %221 = vmatpush.bf16.msra.mxu0 %v184
    %222 = vmatpush.bf16.msra.mxu0 %v182
    %223 = vmatpush.bf16.msra.mxu0 %v180
    %224 = vmatpush.bf16.msra.mxu0 %v178
    %225 = vmatpush.bf16.msra.mxu0 %v176
    %226 = vmatpush.bf16.msra.mxu0 %v174
    %227 = vmatmul.bf16.gmra.mxu0 %v102
    %v228 = vpop.f32.mrf.mxu0
    %v229 = vadd.f32 %v122, %v228
    %v230 = vpop.f32.mrf.mxu0
    %v231 = vadd.f32 %v122, %v230
    %232 = vdwg.mxu0
    %v233 = vpack.c.bf16 %v217, %v215
    %v234 = vpack.c.bf16 %v231, %v229
    %v235 = vld [vmem:[#allocation8] sm:$0xf]
    %v236 = vld [vmem:[#allocation8 + $0x4] sm:$0xf]
    %v237 = vld [vmem:[#allocation8 + $0x8] sm:$0xf]
    %v238 = vld [vmem:[#allocation8 + $0xc] sm:$0xf]
    %v239 = vld [vmem:[#allocation8 + $0x10] sm:$0xf]
    %v240 = vld [vmem:[#allocation8 + $0x14] sm:$0xf]
    %v241 = vld [vmem:[#allocation8 + $0x18] sm:$0xf]
    %v242 = vld [vmem:[#allocation8 + $0x1c] sm:$0xf]
    %v243 = vld [vmem:[#allocation8 + $0x20] sm:$0xf]
    %v244 = vld [vmem:[#allocation8 + $0x24] sm:$0xf]
    %v245 = vld [vmem:[#allocation8 + $0x28] sm:$0xf]
    %v246 = vld [vmem:[#allocation8 + $0x2c] sm:$0xf]
    %v247 = vld [vmem:[#allocation8 + $0x30] sm:$0xf]
    %v248 = vld [vmem:[#allocation8 + $0x34] sm:$0xf]
    %v249 = vld [vmem:[#allocation8 + $0x38] sm:$0xf]
    %v250 = vld [vmem:[#allocation8 + $0x3c] sm:$0xf]
    %v251 = vld [vmem:[#allocation8 + $0x40] sm:$0xf]
    %v252 = vld [vmem:[#allocation8 + $0x44] sm:$0xf]
    %v253 = vld [vmem:[#allocation8 + $0x48] sm:$0xf]
    %v254 = vld [vmem:[#allocation8 + $0x4c] sm:$0xf]
    %v255 = vld [vmem:[#allocation8 + $0x50] sm:$0xf]
    %v256 = vld [vmem:[#allocation8 + $0x54] sm:$0xf]
    %v257 = vld [vmem:[#allocation8 + $0x58] sm:$0xf]
    %v258 = vld [vmem:[#allocation8 + $0x5c] sm:$0xf]
    %v259 = vld [vmem:[#allocation8 + $0x60] sm:$0xf]
    %v260 = vld [vmem:[#allocation8 + $0x64] sm:$0xf]
    %v261 = vld [vmem:[#allocation8 + $0x68] sm:$0xf]
    %v262 = vld [vmem:[#allocation8 + $0x6c] sm:$0xf]
    %v263 = vld [vmem:[#allocation8 + $0x70] sm:$0xf]
    %v264 = vld [vmem:[#allocation8 + $0x74] sm:$0xf]
    %v265 = vld [vmem:[#allocation8 + $0x78] sm:$0xf]
    %v266 = vld [vmem:[#allocation8 + $0x7c] sm:$0xf]
    %v267 = vld [vmem:[%s4] sm:$0x1]
    %v269 = vperm.slane %v267, 0
    %v303 = vunpack.c.l.b16 %v235
    %v304 = vunpack.c.l.b16 %v236
    %v305 = vunpack.c.l.b16 %v237
    %v306 = vunpack.c.l.b16 %v238
    %v307 = vunpack.c.l.b16 %v239
    %v308 = vunpack.c.l.b16 %v240
    %v309 = vunpack.c.l.b16 %v241
    %v310 = vunpack.c.l.b16 %v242
    %v311 = vunpack.c.l.b16 %v243
    %v312 = vunpack.c.l.b16 %v244
    %v313 = vunpack.c.l.b16 %v245
    %v314 = vunpack.c.l.b16 %v246
    %v315 = vunpack.c.l.b16 %v247
    %v316 = vunpack.c.l.b16 %v248
    %v317 = vunpack.c.l.b16 %v249
    %v318 = vunpack.c.l.b16 %v250
    %v319 = vunpack.c.l.b16 %v251
    %v320 = vunpack.c.l.b16 %v252
    %v321 = vunpack.c.l.b16 %v253
    %v322 = vunpack.c.l.b16 %v254
    %v323 = vunpack.c.l.b16 %v255
    %v324 = vunpack.c.l.b16 %v256
    %v325 = vunpack.c.l.b16 %v257
    %v326 = vunpack.c.l.b16 %v258
    %v327 = vunpack.c.l.b16 %v259
    %v328 = vunpack.c.l.b16 %v260
    %v329 = vunpack.c.l.b16 %v261
    %v330 = vunpack.c.l.b16 %v262
    %v331 = vunpack.c.l.b16 %v263
    %v332 = vunpack.c.l.b16 %v264
    %v333 = vunpack.c.l.b16 %v265
    %v334 = vunpack.c.l.b16 %v266
    %v335 = vpack.c.b16 %v304, %v303
    %v336 = vpack.c.b16 %v306, %v305
    %v337 = vpack.c.b16 %v308, %v307
    %v338 = vpack.c.b16 %v310, %v309
    %v339 = vpack.c.b16 %v312, %v311
    %v340 = vpack.c.b16 %v314, %v313
    %v341 = vpack.c.b16 %v316, %v315
    %v342 = vpack.c.b16 %v318, %v317
    %v343 = vpack.c.b16 %v320, %v319
    %v344 = vpack.c.b16 %v322, %v321
    %v345 = vpack.c.b16 %v324, %v323
    %v346 = vpack.c.b16 %v326, %v325
    %v347 = vpack.c.b16 %v328, %v327
    %v348 = vpack.c.b16 %v330, %v329
    %v349 = vpack.c.b16 %v332, %v331
    %v350 = vpack.c.b16 %v334, %v333
    %367 = vmatpush.bf16.msra.mxu0 %v342
    %368 = vmatpush.bf16.msra.mxu0 %v341
    %369 = vmatpush.bf16.msra.mxu0 %v340
    %370 = vmatpush.bf16.msra.mxu0 %v339
    %371 = vmatpush.bf16.msra.mxu0 %v338
    %372 = vmatpush.bf16.msra.mxu0 %v337
    %373 = vmatpush.bf16.msra.mxu0 %v336
    %374 = vmatpush.bf16.msra.mxu0 %v335
    %375 = vmatmul.bf16.gmra.mxu0 %v233
    %v376 = vpop.f32.mrf.mxu0
    %v377 = vadd.f32 %v269, %v376
    %v378 = vpop.f32.mrf.mxu0
    %v379 = vadd.f32 %v269, %v378
    %380 = vdwg.mxu0
    %381 = vmatpush.bf16.msra.mxu0 %v350
    %382 = vmatpush.bf16.msra.mxu0 %v349
    %383 = vmatpush.bf16.msra.mxu0 %v348
    %384 = vmatpush.bf16.msra.mxu0 %v347
    %385 = vmatpush.bf16.msra.mxu0 %v346
    %386 = vmatpush.bf16.msra.mxu0 %v345
    %387 = vmatpush.bf16.msra.mxu0 %v344
    %388 = vmatpush.bf16.msra.mxu0 %v343
    %389 = vmatmul.bf16.gmra.mxu0 %v234
    %v390 = vpop.f32.mrf.mxu0
    %v391 = vadd.f32 %v377, %v390
    %v392 = vpop.f32.mrf.mxu0
    %v393 = vadd.f32 %v379, %v392
    %394 = vdwg.mxu0
    %v395 = vmax.f32 %v391, 0.0
    %v396 = vmax.f32 %v393, 0.0
    %v397 = vld [vmem:[#allocation10] sm:$0xff]
    %v398 = vld [vmem:[#allocation10 + $0x8] sm:$0xff]
    %vm399 = vcmp.ge.f32.partialorder %v397, 0.1
    %vm400 = vcmp.ge.f32.partialorder %v398, 0.1
    %v401 = vmul.f32 %v395, 1.1111112
    %v402 = vmul.f32 %v396, 1.1111112
    %v403 = vsel %vm399, %v401, 0.0
    %v404 = vsel %vm400, %v402, 0.0
    %405 = vst [vmem:[#allocation11] sm:$0xff] %v403
    %406 = vst [vmem:[#allocation11 + $0x8] sm:$0xff] %v404
    // Predicated region
    $region46: #{tpu_custom_call.1} parent=1 // pred_check
      _
    $region47: #{tpu_custom_call.1} parent=1 // pred_check_branch
      %408 = sbr.rel (0) target = $region49
    $region48: #{tpu_custom_call.1} parent=1 // pred_region
      %410 = vsyncadd [#allocation4], 0
      %s411 = sshll.u32 [#allocation11], 4
      %s412 = int_to_ptr.vmem [resolvable:$true] %s411
      %s413 = sshll.u32 %s6, 4
      %s414 = int_to_ptr.hbm [resolvable:$true] %s413
      %419 = dma.vmem_to_hbm [thread:$0]  %s412, 256, %s414, [#allocation4], 128, 128, 8
    $region49: #{tpu_custom_call.1} parent=1 // pred_fallthru
      _
    // Predicated region
    $region50: #{tpu_custom_call.1} parent=1 // pred_check
      _
    $region51: #{tpu_custom_call.1} parent=1 // pred_check_branch
      %421 = sbr.rel (0) target = $region53
    $region52: #{tpu_custom_call.1} parent=1 // pred_region
      %423 = dma.done [#allocation4], 256
    $region53: #{tpu_custom_call.1} parent=1 // pred_fallthru
      _
    %424 = vsyncpa [#allocation3], 1
    %425 = vsyncpa [#allocation6], 1
    %426 = vsyncpa [#allocation9], 1
    %427 = vsyncpa [#allocation4], 1

</llo_original>
